<compile_context>
chip_gen: v7x
topology: tpu7x:2x2x1
jax: 0.10.0
libtpu: 0.0.40
codegen_flags: <defaults>
</compile_context>

<pallas_src>
import functools
import numpy as np
import jax
import jax.numpy as jnp
from jax.experimental import pallas as pl
from jax.experimental.pallas import tpu as pltpu

# ---------------- model hyper-params (small, deterministic) ----------------
BATCH = 2
VOCAB_SIZE = 100
EMBED_DIM = 16          # conv "length" axis
MAX_SEQ_LEN = 8         # conv "channel" axis
OUTPUT_DIM = 6
STRIDE = 2
KERNEL_SIZES = (2, 3, 4, 5)

S = MAX_SEQ_LEN
E = EMBED_DIM
NCH = 2 * S                                                  # 16 out-channels per conv branch
L_OUT = tuple((E - K) // STRIDE + 1 for K in KERNEL_SIZES)   # (8, 7, 7, 6) conv positions
SK = tuple(S * K for K in KERNEL_SIZES)                      # (16, 24, 32, 40) patch widths
COL_OFF = tuple(int(v) for v in np.cumsum((0,) + SK[:-1]))   # (0, 16, 40, 72)
ROW_OFF = tuple(int(v) for v in np.cumsum((0,) + L_OUT[:-1]))  # (0, 8, 15, 22)
TOTAL_ROWS = sum(L_OUT)                                      # 28 conv rows per batch element
R_PER_BATCH = -(-TOTAL_ROWS // 8) * 8                        # 32 (sublane aligned)
KDIM = 128                                                   # sum(SK)=112 + 4 indicator cols + pad
AUG_COL = sum(SK)                                            # 112 : branch-indicator columns 112..115
N_CONV = 4 * NCH                                             # 64 concatenated conv features
ONE_COL = N_CONV                                             # 64 : constant-one feature (fc-bias carrier)
NOUT = 128                                                   # lane-dense width everywhere
NEG = -1.0e9                                                 # "minus infinity" for off-branch blocks


# ---------------- static im2col / packing maps (numpy, trace-time constants) ----------------
def _build_im2col_maps():
    idx = np.zeros((R_PER_BATCH, KDIM), np.int32)     # index into flattened [S*E] features
    msk = np.zeros((R_PER_BATCH, KDIM), np.float32)   # 1 where a real patch value lives
    aug = np.zeros((R_PER_BATCH, KDIM), np.float32)   # branch indicator columns
    for i, K in enumerate(KERNEL_SIZES):
        for l in range(L_OUT[i]):
            r = ROW_OFF[i] + l
            aug[r, AUG_COL + i] = 1.0
            for c in range(S):
                for k in range(K):
                    idx[r, COL_OFF[i] + c * K + k] = c * E + STRIDE * l + k
                    msk[r, COL_OFF[i] + c * K + k] = 1.0
    return idx, msk, aug


IM2COL_IDX, IM2COL_MASK, IM2COL_AUG = _build_im2col_maps()


# ---------------- Pallas kernel: one fused conv-dot + relu + maxpool + fc-dot ----------------
def textcnn_kernel(patch_ref, w_ref, fc_ref, o_ref, *, batch, rows_per_batch, out_rows):
    # fused conv: [B*R, 128] @ [128, 128] -> columns 0..63 = 4 conv branches, col 64 = const 1
    conv = jnp.dot(patch_ref[...], w_ref[...], preferred_element_type=jnp.float32)
    act = jnp.maximum(conv, 0.0)                                        # ReLU
    # global max over conv positions per batch element (padded / off-branch rows are 0 <= max)
    pooled = jnp.max(act.reshape(batch, rows_per_batch, NOUT), axis=1)  # [B, 128]
    if out_rows > batch:                                                # sublane-pad to 8 rows
        pooled = jnp.concatenate(
            [pooled, jnp.zeros((out_rows - batch, NOUT), jnp.float32)], axis=0)
    # FC (+bias via the constant-one column), lane-dense [8, 128] unmasked store
    o_ref[...] = jnp.dot(pooled, fc_ref[...], preferred_element_type=jnp.float32)


# ---------------- parameter packing (done once, outside the forward) ----------------
def pack_params(params):
    # block-diagonal conv weight slab + folded biases / indicator rows
    w_slab = jnp.zeros((KDIM, NOUT), jnp.float32)
    for i, K in enumerate(KERNEL_SIZES):
        wt = params[f"conv{K}_w"].reshape(NCH, S * K).T                 # [S*K, 16]
        w_slab = w_slab.at[COL_OFF[i]:COL_OFF[i] + SK[i], i * NCH:(i + 1) * NCH].set(wt)
        aug_row = jnp.zeros((NOUT,), jnp.float32)
        aug_row = aug_row.at[:N_CONV].set(NEG)                          # kill off-branch blocks
        aug_row = aug_row.at[i * NCH:(i + 1) * NCH].set(params[f"conv{K}_b"])  # own bias
        aug_row = aug_row.at[ONE_COL].set(1.0)                          # constant-one feature
        w_slab = w_slab.at[AUG_COL + i, :].set(aug_row)

    # fc slab: rows 0..63 = W_fc^T (cols 0..5), row 64 = fc bias, rest zero
    fc_slab = jnp.zeros((NOUT, NOUT), jnp.float32)
    fc_slab = fc_slab.at[:N_CONV, :OUTPUT_DIM].set(params["fc_w"].T)
    fc_slab = fc_slab.at[ONE_COL, :OUTPUT_DIM].set(params["fc_b"])

    return {"embedding": params["embedding"], "w_slab": w_slab, "fc_slab": fc_slab}


# ---------------- forward: embedding gather + single im2col gather + pallas_call ----------------
@jax.jit
def textcnn_forward(x_tokens, packed):
    B = x_tokens.shape[0]
    feats = packed["embedding"][x_tokens]                     # [B, S, E]
    flat = feats.reshape(B, S * E)                            # [B, 128]
    patches = jnp.take(flat, jnp.asarray(IM2COL_IDX), axis=1)  # [B, R, 128] one gather
    patches = patches * IM2COL_MASK[None] + IM2COL_AUG[None]
    patch_slab = patches.reshape(B * R_PER_BATCH, KDIM)        # [B*32, 128]

    out_rows = -(-B // 8) * 8                                  # sublane-dense output rows
    kernel = functools.partial(textcnn_kernel, batch=B,
                               rows_per_batch=R_PER_BATCH, out_rows=out_rows)
    vmem = pl.BlockSpec(memory_space=pltpu.MemorySpace.VMEM)
    out = pl.pallas_call(
        kernel,
        out_shape=jax.ShapeDtypeStruct((out_rows, NOUT), jnp.float32),
        in_specs=[vmem, vmem, vmem],
        out_specs=vmem,
    )(patch_slab, packed["w_slab"], packed["fc_slab"])
    return out[:B, :OUTPUT_DIM]


# ---------------- pure-JAX reference (independent conv implementation) ----------------
def textcnn_reference(x_tokens, params):
    features = params["embedding"][x_tokens]                  # [B, S, E] (NCL for conv1d)
    pooled = []
    for K in KERNEL_SIZES:
        W = params[f"conv{K}_w"]                              # [O=2S, I=S, K]
        b = params[f"conv{K}_b"]
        conv = jax.lax.conv_general_dilated(
            features, W, window_strides=(STRIDE,), padding="VALID",
            dimension_numbers=("NCH", "OIH", "NCH"))          # [B, 2S, L]
        conv = jax.nn.relu(conv + b[None, :, None])
        pooled.append(jnp.max(conv, axis=2))                  # MaxPool1d(L) + squeeze -> [B, 2S]
    union = jnp.concatenate(pooled, axis=1)                   # [B, 8S]
    return union @ params["fc_w"].T + params["fc_b"]


# ---------------- deterministic parameter construction ----------------
def init_params(key):
    keys = jax.random.split(key, 2 + 2 * len(KERNEL_SIZES) + 2)
    params = {}
    params["embedding"] = jax.random.normal(keys[0], (VOCAB_SIZE, EMBED_DIM), jnp.float32)
    ki = 1
    for K in KERNEL_SIZES:
        fan_in = MAX_SEQ_LEN * K
        bound = 1.0 / np.sqrt(fan_in)
        params[f"conv{K}_w"] = jax.random.uniform(
            keys[ki], (2 * MAX_SEQ_LEN, MAX_SEQ_LEN, K), jnp.float32, -bound, bound)
        params[f"conv{K}_b"] = jax.random.uniform(
            keys[ki + 1], (2 * MAX_SEQ_LEN,), jnp.float32, -bound, bound)
        ki += 2
    fan_in_fc = 8 * MAX_SEQ_LEN
    bound = 1.0 / np.sqrt(fan_in_fc)
    params["fc_w"] = jax.random.uniform(keys[ki], (OUTPUT_DIM, fan_in_fc), jnp.float32, -bound, bound)
    params["fc_b"] = jax.random.uniform(keys[ki + 1], (OUTPUT_DIM,), jnp.float32, -bound, bound)
    return params
    # TODO(synk): LabelEmbedding branch (use_label_embed=True) not implemented; default forward path only.


if __name__ == "__main__":
    key = jax.random.PRNGKey(0)
    k_param, k_x = jax.random.split(key)
    params = init_params(k_param)
    packed = pack_params(params)
    x = jax.random.randint(k_x, (BATCH, MAX_SEQ_LEN), 0, VOCAB_SIZE, dtype=jnp.int32)

    out = jax.block_until_ready(textcnn_forward(x, packed))
    ref = jax.block_until_ready(textcnn_reference(x, params))

    np.testing.assert_allclose(np.asarray(out), np.asarray(ref), rtol=1e-5, atol=1e-5)
    assert out.shape == (BATCH, OUTPUT_DIM)
    print("KERNEL_OK")
</pallas_src>

<mosaic_0001>
module attributes {stable_mosaic.version = 11 : i64} {
  func.func @textcnn_kernel(%arg0: memref<64x128xf32, #tpu.memory_space<vmem>>, %arg1: memref<128x128xf32, #tpu.memory_space<vmem>>, %arg2: memref<128x128xf32, #tpu.memory_space<vmem>>, %arg3: memref<8x128xf32, #tpu.memory_space<vmem>>) attributes {dimension_semantics = [], scalar_prefetch = 0 : i64, scratch_operands = 0 : i64, tpu.core_type = #tpu.core_type<tc>} {
    %c0 = arith.constant 0 : index
    %c0_0 = arith.constant 0 : index
    %0 = vector.load %arg0[%c0, %c0_0] : memref<64x128xf32, #tpu.memory_space<vmem>>, vector<64x128xf32>
    %c0_1 = arith.constant 0 : index
    %c0_2 = arith.constant 0 : index
    %1 = vector.load %arg1[%c0_1, %c0_2] : memref<128x128xf32, #tpu.memory_space<vmem>>, vector<128x128xf32>
    %cst = arith.constant dense<0.000000e+00> : vector<64x128xf32>
    %2 = tpu.matmul %0, %1, %cst {dimension_numbers = #tpu.dot_dimension_numbers<[1], [0], [0], [1], [0, 0, 1, 1], [], []>} : vector<64x128xf32>, vector<128x128xf32>, vector<64x128xf32> -> vector<64x128xf32>
    %cst_3 = arith.constant 0.000000e+00 : f32
    %3 = vector.broadcast %cst_3 : f32 to vector<64x128xf32>
    %4 = arith.maximumf %2, %3 : vector<64x128xf32>
    %5 = vector.shape_cast %4 : vector<64x128xf32> to vector<2x32x128xf32>
    %cst_4 = arith.constant dense<0xFF800000> : vector<2x128xf32>
    %6 = vector.multi_reduction <maximumf>, %5, %cst_4 [1] : vector<2x32x128xf32> to vector<2x128xf32>
    %cst_5 = arith.constant 0.000000e+00 : f32
    %7 = vector.broadcast %cst_5 : f32 to vector<6x128xf32>
    %8 = tpu.concatenate %6, %7 in 0 : vector<2x128xf32>, vector<6x128xf32> -> vector<8x128xf32>
    %c0_6 = arith.constant 0 : index
    %c0_7 = arith.constant 0 : index
    %9 = vector.load %arg2[%c0_6, %c0_7] : memref<128x128xf32, #tpu.memory_space<vmem>>, vector<128x128xf32>
    %cst_8 = arith.constant dense<0.000000e+00> : vector<8x128xf32>
    %10 = tpu.matmul %8, %9, %cst_8 {dimension_numbers = #tpu.dot_dimension_numbers<[1], [0], [0], [1], [0, 0, 1, 1], [], []>} : vector<8x128xf32>, vector<128x128xf32>, vector<8x128xf32> -> vector<8x128xf32>
    %c0_9 = arith.constant 0 : index
    %c0_10 = arith.constant 0 : index
    %11 = vector.load %arg3[%c0_9, %c0_10] : memref<8x128xf32, #tpu.memory_space<vmem>>, vector<8x128xf32>
    tpu.vector_store %arg3[%c0_9, %c0_10], %10 {strides = array<i32>} : memref<8x128xf32, #tpu.memory_space<vmem>>, vector<8x128xf32>,
    return
  }
}

</mosaic_0001>

<llo_original>
// kernel: textcnn_forward.1
$region0: #{textcnn_forward.1}
  #allocation0 [shape = 'u32[]', space=smem, size = 0x4, offset = 0x4, fixed_abs, tag = 'smem constant byte address 0x4 - core index']
  #allocation1 [shape = 'u32[144,128]{1,0:T(1,128)}', space=vmem, size = 0x12000, scoped, tag = 'internal scratch']
  %s0 = inlined_call_operand.vmem [shape: f32[64,128], index: 0, kind: input, shape index: {}]
  %s1 = inlined_call_operand.vmem [shape: f32[128,128], index: 1, kind: input, shape index: {}]
  %s2 = inlined_call_operand.vmem [shape: f32[128,128], index: 2, kind: input, shape index: {}]
  %s3 = inlined_call_operand.vmem [shape: f32[8,128], index: 3, kind: output, shape index: {}]
  %s4 = sld [smem:[#allocation0]]
  $region22: #{textcnn_forward.1} parent=0
    _
  %s6 = ssub.s32 1, %s4
  %s7 = scalar_select 0, %s6, %s4
  // Predicated region
  $region2: #{textcnn_forward.1} parent=0 // pred_check
    _
  $region3: #{textcnn_forward.1} parent=0 // pred_check_branch
    %9 = sbr.rel (0) target = $region5
  $region4: #{textcnn_forward.1} parent=0 // pred_region
    _
  $region5: #{textcnn_forward.1} parent=0 // pred_fallthru
    _
  // Predicated region
  $region6: #{textcnn_forward.1} parent=0 // pred_check
    _
  $region7: #{textcnn_forward.1} parent=0 // pred_check_branch
    %11 = sbr.rel (0) target = $region9
  $region8: #{textcnn_forward.1} parent=0 // pred_region
    _
  $region9: #{textcnn_forward.1} parent=0 // pred_fallthru
    _
  // Predicated region
  $region10: #{textcnn_forward.1} parent=0 // pred_check
    _
  $region11: #{textcnn_forward.1} parent=0 // pred_check_branch
    %13 = sbr.rel (0) target = $region13
  $region12: #{textcnn_forward.1} parent=0 // pred_region
    _
  $region13: #{textcnn_forward.1} parent=0 // pred_fallthru
    _
  %v14 = vld [vmem:[%s0] sm:$0xff]
  %v15 = vld [vmem:[%s0 + $0x8] sm:$0xff]
  %v16 = vld [vmem:[%s0 + $0x10] sm:$0xff]
  %v17 = vld [vmem:[%s0 + $0x18] sm:$0xff]
  %v18 = vld [vmem:[%s0 + $0x20] sm:$0xff]
  %v19 = vld [vmem:[%s0 + $0x28] sm:$0xff]
  %v20 = vld [vmem:[%s0 + $0x30] sm:$0xff]
  %v21 = vld [vmem:[%s0 + $0x38] sm:$0xff]
  %v22 = vld [vmem:[%s1] sm:$0xff]
  %v23 = vld [vmem:[%s1 + $0x8] sm:$0xff]
  %v24 = vld [vmem:[%s1 + $0x10] sm:$0xff]
  %v25 = vld [vmem:[%s1 + $0x18] sm:$0xff]
  %v26 = vld [vmem:[%s1 + $0x20] sm:$0xff]
  %v27 = vld [vmem:[%s1 + $0x28] sm:$0xff]
  %v28 = vld [vmem:[%s1 + $0x30] sm:$0xff]
  %v29 = vld [vmem:[%s1 + $0x38] sm:$0xff]
  %v30 = vld [vmem:[%s1 + $0x40] sm:$0xff]
  %v31 = vld [vmem:[%s1 + $0x48] sm:$0xff]
  %v32 = vld [vmem:[%s1 + $0x50] sm:$0xff]
  %v33 = vld [vmem:[%s1 + $0x58] sm:$0xff]
  %v34 = vld [vmem:[%s1 + $0x60] sm:$0xff]
  %v35 = vld [vmem:[%s1 + $0x68] sm:$0xff]
  %v36 = vld [vmem:[%s1 + $0x70] sm:$0xff]
  %v37 = vld [vmem:[%s1 + $0x78] sm:$0xff]
  %38 = vmatprep.subr.mxu0 0.0
  %39 = vmatpush1.msra.mxu0 %v22
  %40 = vmatprep.subr.mxu0 0.0
  %41 = vmatpush1.msra.mxu0 %v23
  %42 = vmatprep.subr.mxu0 0.0
  %43 = vmatpush1.msra.mxu0 %v24
  %44 = vmatprep.subr.mxu0 0.0
  %45 = vmatpush1.msra.mxu0 %v25
  %46 = vmatprep.subr.mxu0 0.0
  %47 = vmatpush1.msra.mxu0 %v26
  %48 = vmatprep.subr.mxu0 0.0
  %49 = vmatpush1.msra.mxu0 %v27
  %50 = vmatprep.subr.mxu0 0.0
  %51 = vmatpush1.msra.mxu0 %v28
  %52 = vmatprep.subr.mxu0 0.0
  %53 = vmatpush1.msra.mxu0 %v29
  %54 = vmatprep.subr.mxu0 0.0
  %55 = vmatpush1.msra.mxu0 %v30
  %56 = vmatprep.subr.mxu0 0.0
  %57 = vmatpush1.msra.mxu0 %v31
  %58 = vmatprep.subr.mxu0 0.0
  %59 = vmatpush1.msra.mxu0 %v32
  %60 = vmatprep.subr.mxu0 0.0
  %61 = vmatpush1.msra.mxu0 %v33
  %62 = vmatprep.subr.mxu0 0.0
  %63 = vmatpush1.msra.mxu0 %v34
  %64 = vmatprep.subr.mxu0 0.0
  %65 = vmatpush1.msra.mxu0 %v35
  %66 = vmatprep.subr.mxu0 0.0
  %67 = vmatpush1.msra.mxu0 %v36
  %68 = vmatprep.subr.mxu0 0.0
  %69 = vmatpush1.msra.mxu0 %v37
  %70 = vmatprep.subr.mxu0 0.0
  %71 = vmatpush1.msra.mxu0 0.0
  %72 = vmatprep.subr.mxu0 0.0
  %73 = vmatpush1.msra.mxu0 0.0
  %74 = vmatprep.subr.mxu0 0.0
  %75 = vmatpush1.msra.mxu0 0.0
  %76 = vmatprep.subr.mxu0 0.0
  %77 = vmatpush1.msra.mxu0 0.0
  %78 = vmatprep.subr.mxu0 0.0
  %79 = vmatpush1.msra.mxu0 0.0
  %80 = vmatprep.subr.mxu0 0.0
  %81 = vmatpush1.msra.mxu0 0.0
  %82 = vmatprep.subr.mxu0 0.0
  %83 = vmatpush1.msra.mxu0 0.0
  %84 = vmatprep.subr.mxu0 0.0
  %85 = vmatpush1.msra.mxu0 0.0
  %86 = vmatprep.subr.mxu0 0.0
  %87 = vmatpush1.msra.mxu0 0.0
  %88 = vmatprep.subr.mxu0 0.0
  %89 = vmatpush1.msra.mxu0 0.0
  %90 = vmatprep.subr.mxu0 0.0
  %91 = vmatpush1.msra.mxu0 0.0
  %92 = vmatprep.subr.mxu0 0.0
  %93 = vmatpush1.msra.mxu0 0.0
  %94 = vmatprep.subr.mxu0 0.0
  %95 = vmatpush1.msra.mxu0 0.0
  %96 = vmatprep.subr.mxu0 0.0
  %97 = vmatpush1.msra.mxu0 0.0
  %98 = vmatprep.subr.mxu0 0.0
  %99 = vmatpush1.msra.mxu0 0.0
  %100 = vmatprep.subr.mxu0 0.0
  %101 = vmatpush1.msra.mxu0 0.0
  %102 = vmatprep.mubr.f32.mxu0 0.0
  %103 = vmatmul.mubr.f32.gmra.mrb[0].mxu0 %v14
  %v104 = vpop.f32.mrb[0].mxu0
  %v105 = vadd.f32 0.0, %v104
  %v106 = vpop.f32.mrb[0].mxu0
  %107 = vmatprep.mubr.f32.mxu0 0.0
  %108 = vmatmul.mubr.f32.gmra.mrb[0].mxu0 %v15
  %v109 = vpop.f32.mrb[0].mxu0
  %v110 = vadd.f32 0.0, %v109
  %v111 = vpop.f32.mrb[0].mxu0
  %112 = vmatprep.mubr.f32.mxu0 0.0
  %113 = vmatmul.mubr.f32.gmra.mrb[0].mxu0 %v16
  %v114 = vpop.f32.mrb[0].mxu0
  %v115 = vadd.f32 0.0, %v114
  %v116 = vpop.f32.mrb[0].mxu0
  %117 = vmatprep.mubr.f32.mxu0 0.0
  %118 = vmatmul.mubr.f32.gmra.mrb[0].mxu0 %v17
  %v119 = vpop.f32.mrb[0].mxu0
  %v120 = vadd.f32 0.0, %v119
  %v121 = vpop.f32.mrb[0].mxu0
  %122 = vmatprep.mubr.f32.mxu0 0.0
  %123 = vmatmul.mubr.f32.gmra.mrb[0].mxu0 %v18
  %v124 = vpop.f32.mrb[0].mxu0
  %v125 = vadd.f32 0.0, %v124
  %v126 = vpop.f32.mrb[0].mxu0
  %127 = vmatprep.mubr.f32.mxu0 0.0
  %128 = vmatmul.mubr.f32.gmra.mrb[0].mxu0 %v19
  %v129 = vpop.f32.mrb[0].mxu0
  %v130 = vadd.f32 0.0, %v129
  %v131 = vpop.f32.mrb[0].mxu0
  %132 = vmatprep.mubr.f32.mxu0 0.0
  %133 = vmatmul.mubr.f32.gmra.mrb[0].mxu0 %v20
  %v134 = vpop.f32.mrb[0].mxu0
  %v135 = vadd.f32 0.0, %v134
  %v136 = vpop.f32.mrb[0].mxu0
  %137 = vmatprep.mubr.f32.mxu0 0.0
  %138 = vmatmul.mubr.f32.gmra.mrb[0].mxu0 %v21
  %v139 = vpop.f32.mrb[0].mxu0
  %v140 = vadd.f32 0.0, %v139
  %v141 = vpop.f32.mrb[0].mxu0
  %142 = vdwg.mxu0
  %v143 = vmax.f32 %v105, 0.0
  %v144 = vmax.f32 %v110, 0.0
  %v145 = vmax.f32 %v115, 0.0
  %v146 = vmax.f32 %v120, 0.0
  %v147 = vmax.f32 %v125, 0.0
  %v148 = vmax.f32 %v130, 0.0
  %v149 = vmax.f32 %v135, 0.0
  %v150 = vmax.f32 %v140, 0.0
  %v151 = vmax.f32 %v143, %v145
  %v152 = vmax.f32 %v144, %v146
  %v153 = vmax.f32 %v151, %v152
  %v154 = vrot.slane %v153, 4
  %v155 = vmax.f32 %v153, %v154
  %v156 = vrot.slane %v155, 2
  %v157 = vmax.f32 %v155, %v156
  %v158 = vrot.slane %v157, 1
  %v159 = vmax.f32 %v157, %v158
  %v160 = vmax.f32 %v147, %v149
  %v161 = vmax.f32 %v148, %v150
  %v162 = vmax.f32 %v160, %v161
  %v163 = vrot.slane %v162, 4
  %v164 = vmax.f32 %v162, %v163
  %v165 = vrot.slane %v164, 2
  %v166 = vmax.f32 %v164, %v165
  %v167 = vrot.slane %v166, 1
  %v168 = vmax.f32 %v166, %v167
  %vm171 = vcmask 1041409
  %v172 = vsel %vm171, %v168, %v159
  %vm174 = vcmask 1041408
  %v175 = vsel %vm174, %v172, 0.0
  %v176 = vld [vmem:[%s2] sm:$0xff]
  %v177 = vld [vmem:[%s2 + $0x8] sm:$0xff]
  %v178 = vld [vmem:[%s2 + $0x10] sm:$0xff]
  %v179 = vld [vmem:[%s2 + $0x18] sm:$0xff]
  %v180 = vld [vmem:[%s2 + $0x20] sm:$0xff]
  %v181 = vld [vmem:[%s2 + $0x28] sm:$0xff]
  %v182 = vld [vmem:[%s2 + $0x30] sm:$0xff]
  %v183 = vld [vmem:[%s2 + $0x38] sm:$0xff]
  %v184 = vld [vmem:[%s2 + $0x40] sm:$0xff]
  %v185 = vld [vmem:[%s2 + $0x48] sm:$0xff]
  %v186 = vld [vmem:[%s2 + $0x50] sm:$0xff]
  %v187 = vld [vmem:[%s2 + $0x58] sm:$0xff]
  %v188 = vld [vmem:[%s2 + $0x60] sm:$0xff]
  %v189 = vld [vmem:[%s2 + $0x68] sm:$0xff]
  %v190 = vld [vmem:[%s2 + $0x70] sm:$0xff]
  %v191 = vld [vmem:[%s2 + $0x78] sm:$0xff]
  %192 = vmatprep.subr.mxu0 0.0
  %193 = vmatpush1.msra.mxu0 %v176
  %194 = vmatprep.subr.mxu0 0.0
  %195 = vmatpush1.msra.mxu0 %v177
  %196 = vmatprep.subr.mxu0 0.0
  %197 = vmatpush1.msra.mxu0 %v178
  %198 = vmatprep.subr.mxu0 0.0
  %199 = vmatpush1.msra.mxu0 %v179
  %200 = vmatprep.subr.mxu0 0.0
  %201 = vmatpush1.msra.mxu0 %v180
  %202 = vmatprep.subr.mxu0 0.0
  %203 = vmatpush1.msra.mxu0 %v181
  %204 = vmatprep.subr.mxu0 0.0
  %205 = vmatpush1.msra.mxu0 %v182
  %206 = vmatprep.subr.mxu0 0.0
  %207 = vmatpush1.msra.mxu0 %v183
  %208 = vmatprep.subr.mxu0 0.0
  %209 = vmatpush1.msra.mxu0 %v184
  %210 = vmatprep.subr.mxu0 0.0
  %211 = vmatpush1.msra.mxu0 %v185
  %212 = vmatprep.subr.mxu0 0.0
  %213 = vmatpush1.msra.mxu0 %v186
  %214 = vmatprep.subr.mxu0 0.0
  %215 = vmatpush1.msra.mxu0 %v187
  %216 = vmatprep.subr.mxu0 0.0
  %217 = vmatpush1.msra.mxu0 %v188
  %218 = vmatprep.subr.mxu0 0.0
  %219 = vmatpush1.msra.mxu0 %v189
  %220 = vmatprep.subr.mxu0 0.0
  %221 = vmatpush1.msra.mxu0 %v190
  %222 = vmatprep.subr.mxu0 0.0
  %223 = vmatpush1.msra.mxu0 %v191
  %224 = vmatprep.subr.mxu0 0.0
  %225 = vmatpush1.msra.mxu0 0.0
  %226 = vmatprep.subr.mxu0 0.0
  %227 = vmatpush1.msra.mxu0 0.0
  %228 = vmatprep.subr.mxu0 0.0
  %229 = vmatpush1.msra.mxu0 0.0
  %230 = vmatprep.subr.mxu0 0.0
  %231 = vmatpush1.msra.mxu0 0.0
  %232 = vmatprep.subr.mxu0 0.0
  %233 = vmatpush1.msra.mxu0 0.0
  %234 = vmatprep.subr.mxu0 0.0
  %235 = vmatpush1.msra.mxu0 0.0
  %236 = vmatprep.subr.mxu0 0.0
  %237 = vmatpush1.msra.mxu0 0.0
  %238 = vmatprep.subr.mxu0 0.0
  %239 = vmatpush1.msra.mxu0 0.0
  %240 = vmatprep.subr.mxu0 0.0
  %241 = vmatpush1.msra.mxu0 0.0
  %242 = vmatprep.subr.mxu0 0.0
  %243 = vmatpush1.msra.mxu0 0.0
  %244 = vmatprep.subr.mxu0 0.0
  %245 = vmatpush1.msra.mxu0 0.0
  %246 = vmatprep.subr.mxu0 0.0
  %247 = vmatpush1.msra.mxu0 0.0
  %248 = vmatprep.subr.mxu0 0.0
  %249 = vmatpush1.msra.mxu0 0.0
  %250 = vmatprep.subr.mxu0 0.0
  %251 = vmatpush1.msra.mxu0 0.0
  %252 = vmatprep.subr.mxu0 0.0
  %253 = vmatpush1.msra.mxu0 0.0
  %254 = vmatprep.subr.mxu0 0.0
  %255 = vmatpush1.msra.mxu0 0.0
  %256 = vmatprep.mubr.f32.mxu0 0.0
  %257 = vmatmul.mubr.f32.gmra.mrb[0].mxu0 %v175
  %v258 = vpop.f32.mrb[0].mxu0
  %v259 = vadd.f32 0.0, %v258
  %v260 = vpop.f32.mrb[0].mxu0
  %261 = vdwg.mxu0
  %262 = vst [vmem:[%s3] sm:$0xff] %v259
  // Predicated region
  $region14: #{textcnn_forward.1} parent=0 // pred_check
    _
  $region15: #{textcnn_forward.1} parent=0 // pred_check_branch
    %264 = sbr.rel (0) target = $region17
  $region16: #{textcnn_forward.1} parent=0 // pred_region
    _
  $region17: #{textcnn_forward.1} parent=0 // pred_fallthru
    _
  // Predicated region
  $region18: #{textcnn_forward.1} parent=0 // pred_check
    _
  $region19: #{textcnn_forward.1} parent=0 // pred_check_branch
    %266 = sbr.rel (0) target = $region21
  $region20: #{textcnn_forward.1} parent=0 // pred_region
    _
  $region21: #{textcnn_forward.1} parent=0 // pred_fallthru
    _

</llo_original>
